<compile_context>
chip_gen: v7x
topology: tpu7x:2x2x1
jax: 0.10.0
libtpu: 0.0.40
codegen_flags: <defaults>
</compile_context>

<pallas_src>
import functools

import jax
import jax.numpy as jnp
from jax.experimental import pallas as pl
from jax.experimental.pallas import tpu as pltpu


def _lstm_recurrence_kernel(gx_ref, w_hh_ref, hN_ref, h_sc, c_sc, *,
                            chunk, bt, hidden, seq_len, needs_mask, unroll):
    """One grid step == one (batch_tile, time_chunk) cell of the recurrence.

    gx_ref:    (chunk*BT, 4H)  precomputed input-projection gates for this
                               batch tile / time chunk (time-major, BT rows
                               per step; g-gate columns pre-scaled by 2).
    w_hh_ref:  (H, 4H)         W_hh^T (g columns pre-scaled by 2), Buffered(1).
    hN_ref:    (BT, H)         output: final hidden state for this batch tile.
    h_sc/c_sc: (BT, H)         f32 VMEM-resident LSTM state carried across
                               time chunks (re-initialized at t == 0).
    """
    t = pl.program_id(1)
    H = hidden

    @pl.when(t == 0)
    def _():
        h_sc[...] = jnp.zeros_like(h_sc)
        c_sc[...] = jnp.zeros_like(c_sc)

    w_hh = w_hh_ref[...]

    def step(s, carry):
        h, c = carry
        row = pl.multiple_of(s * bt, bt)
        gx = gx_ref[pl.ds(row, bt), :]                       # (BT, 4H)
        gates = gx + jnp.dot(h.astype(w_hh.dtype), w_hh,
                             preferred_element_type=jnp.float32)

        # One full-width sigmoid over the (BT, 4H) tile (single EUP pass).
        # PyTorch gate order: i, f, g, o.  The g gate was pre-scaled by 2, so
        # tanh(g_pre) == 2*sigmoid(2*g_pre) - 1 falls out of the same sigmoid
        # (no second transcendental on the per-step critical chain).
        sg = jax.nn.sigmoid(gates)
        i_g = sg[:, 0 * H:1 * H]
        f_g = sg[:, 1 * H:2 * H]
        g_g = 2.0 * sg[:, 2 * H:3 * H] - 1.0
        o_g = sg[:, 3 * H:4 * H]

        c_new = f_g * c + i_g * g_g
        h_new = o_g * jnp.tanh(c_new)

        if needs_mask:
            # Only emitted when the sequence was zero-padded to a multiple of
            # the chunk size: padded steps leave the state untouched.
            valid = (t * chunk + s) < seq_len
            c_new = jnp.where(valid, c_new, c)
            h_new = jnp.where(valid, h_new, h)
        return (h_new, c_new)

    h, c = jax.lax.fori_loop(0, chunk, step, (h_sc[...], c_sc[...]),
                             unroll=unroll)
    h_sc[...] = h
    c_sc[...] = c

    @pl.when(t == pl.num_programs(1) - 1)
    def _():
        hN_ref[...] = h.astype(hN_ref.dtype)


def lstm_forward(x, params, *, time_chunk=None, mxu_dtype=jnp.float32):
    """x: (B, N, D) float32.  Returns (B, D) prediction = head(h_N)."""
    B, N, D = x.shape
    w_ih, w_hh = params["w_ih"], params["w_hh"]
    b_ih, b_hh = params["b_ih"], params["b_hh"]
    H = w_hh.shape[1]                                   # w_hh: (4H, H)
    G = 4 * H

    # ---- padding / tiling choices ----------------------------------------
    BT = min(((B + 7) // 8) * 8, 32)                    # batch-tile rows (x8)
    n_btiles = -(-B // BT)
    BP = n_btiles * BT                                  # padded batch rows

    if time_chunk is None:
        # Size the streamed gates chunk DMA to >= ~256 KiB (or whole sequence).
        per_step_bytes = BT * G * 4
        time_chunk = max(8, (256 * 1024) // per_step_bytes)
    Tt = max(1, min(time_chunk, N))
    n_chunks = -(-N // Tt)
    N_pad = n_chunks * Tt
    needs_mask = (N_pad != N)

    # ---- one-time weight prep ---------------------------------------------
    # Pre-scale the g-gate (3rd quarter) columns by 2 so the kernel recovers
    # tanh(g) from the full-width sigmoid: tanh(x) = 2*sigmoid(2x) - 1.
    gscale = jnp.ones((G,), jnp.float32).at[2 * H:3 * H].set(2.0)
    w_ih_t = (w_ih.T.astype(jnp.float32) * gscale)                  # (D, 4H)
    w_hh_t = (w_hh.T.astype(jnp.float32) * gscale).astype(mxu_dtype)  # (H, 4H)
    bias = ((b_ih + b_hh).astype(jnp.float32) * gscale)             # (4H,)

    # ---- hoisted time-parallel input projection (one big XLA GEMM) --------
    x_tm = jnp.transpose(x, (1, 0, 2)).astype(jnp.float32)          # (N, B, D)
    x_tm = jnp.pad(x_tm, ((0, N_pad - N), (0, BP - B), (0, 0)))     # (N_pad, BP, D)
    gates_x = jnp.einsum("tbd,dg->tbg", x_tm, w_ih_t,
                         preferred_element_type=jnp.float32) + bias  # (N_pad, BP, 4H)
    # (N_pad, BP, 4H) -> (n_btiles, N_pad*BT, 4H): one lane-dense 2-D slab per
    # batch tile, time-major with BT rows per step (no in-kernel reshape).
    gates_x = gates_x.reshape(N_pad, n_btiles, BT, G)
    gates_x = jnp.transpose(gates_x, (1, 0, 2, 3)).reshape(
        n_btiles, N_pad * BT, G)

    kernel = functools.partial(
        _lstm_recurrence_kernel,
        chunk=Tt, bt=BT, hidden=H, seq_len=N, needs_mask=needs_mask,
        unroll=min(8, Tt))

    # VMEM budget: double-buffered gates chunk + single-buffered W_hh +
    # state scratch + output tile.  Re-derive when scaling H/D and keep
    # headroom against v7x's 64 MiB physical VMEM.
    gx_chunk_bytes = Tt * BT * G * 4
    w_hh_bytes = H * G * 4
    vmem_limit = int(min(96 << 20,
                         max(32 << 20, 4 * (2 * gx_chunk_bytes + w_hh_bytes))))

    grid_spec = pltpu.PrefetchScalarGridSpec(
        num_scalar_prefetch=0,
        grid=(n_btiles, n_chunks),
        in_specs=[
            # one (batch-tile, time-chunk) slab of precomputed gates per step
            pl.BlockSpec((None, Tt * BT, G), lambda b, t: (b, t, 0)),
            # loop-invariant recurrent weight: constant index_map + Buffered(1)
            # -> fetched once, single-buffered.
            pl.BlockSpec((H, G), lambda b, t: (0, 0),
                         pipeline_mode=pl.Buffered(1)),
        ],
        out_specs=pl.BlockSpec((BT, H), lambda b, t: (b, 0)),
        scratch_shapes=[
            pltpu.VMEM((BT, H), jnp.float32),   # h state (carried over time)
            pltpu.VMEM((BT, H), jnp.float32),   # c state (f32 accumulation)
        ],
    )

    h_n = pl.pallas_call(
        kernel,
        out_shape=jax.ShapeDtypeStruct((BP, H), jnp.float32),
        grid_spec=grid_spec,
        # Batch tiles are independent recurrences ("parallel": v7x megacore
        # shards them across TensorCores); the time axis is a sequential
        # recurrence -> "arbitrary".
        compiler_params=pltpu.CompilerParams(
            dimension_semantics=("parallel", "arbitrary"),
            vmem_limit_bytes=vmem_limit),
    )(gates_x, w_hh_t)

    # Head Linear is time-independent -> applied outside the recurrent kernel
    # (plain XLA GEMM on h_N).  Slice off batch padding.
    pred = h_n[:B] @ params["w_head"].T + params["b_head"]
    return pred


def lstm_forward_ref(x, params):
    """Pure-JAX reference (lax.scan) of the same forward pass."""
    B, N, D = x.shape
    H = params["w_hh"].shape[1]
    w_ih_t = params["w_ih"].T
    w_hh_t = params["w_hh"].T
    b = params["b_ih"] + params["b_hh"]

    def step(carry, x_t):
        h, c = carry
        gates = x_t @ w_ih_t + h @ w_hh_t + b
        i_g = jax.nn.sigmoid(gates[:, 0 * H:1 * H])
        f_g = jax.nn.sigmoid(gates[:, 1 * H:2 * H])
        g_g = jnp.tanh(gates[:, 2 * H:3 * H])
        o_g = jax.nn.sigmoid(gates[:, 3 * H:4 * H])
        c = f_g * c + i_g * g_g
        h = o_g * jnp.tanh(c)
        return (h, c), None

    h0 = jnp.zeros((B, H), jnp.float32)
    c0 = jnp.zeros((B, H), jnp.float32)
    (h_n, _), _ = jax.lax.scan(step, (h0, c0), jnp.transpose(x, (1, 0, 2)))
    return h_n @ params["w_head"].T + params["b_head"]


def init_params(key, input_size, hidden_size):
    D, H = input_size, hidden_size
    ks = jax.random.split(key, 6)
    scale = 1.0 / jnp.sqrt(H)
    return {
        "w_ih": jax.random.uniform(ks[0], (4 * H, D), jnp.float32, -scale, scale),
        "w_hh": jax.random.uniform(ks[1], (4 * H, H), jnp.float32, -scale, scale),
        "b_ih": jax.random.uniform(ks[2], (4 * H,), jnp.float32, -scale, scale),
        "b_hh": jax.random.uniform(ks[3], (4 * H,), jnp.float32, -scale, scale),
        # head: nn.Linear(hidden_size, input_size) -> weight (D, H), bias (D,)
        "w_head": jax.random.uniform(ks[4], (D, H), jnp.float32, -scale, scale),
        "b_head": jax.random.uniform(ks[5], (D,), jnp.float32, -scale, scale),
    }


if __name__ == "__main__":
    B, N, D = 2, 8, 32          # batch, sequence length, feature dim
    H = D                       # hidden_size defaults to input_size

    key = jax.random.PRNGKey(0)
    kx, kp = jax.random.split(key)
    x = jax.random.normal(kx, (B, N, D), jnp.float32)
    params = init_params(kp, D, H)

    pred = lstm_forward(x, params)
    pred = jax.block_until_ready(pred)

    ref = lstm_forward_ref(x, params)
    assert pred.shape == (B, D)
    # The sigma-based tanh(g) (tanh(x) = 2*sigmoid(2x)-1) is mathematically
    # exact but not bit-exact vs jnp.tanh, hence the slightly looser tolerance.
    assert jnp.allclose(pred, ref, atol=1e-4, rtol=1e-4), "mismatch vs JAX reference"

    print("KERNEL_OK")
</pallas_src>

<mosaic_0001>
module attributes {stable_mosaic.version = 11 : i64} {
  func.func @_lstm_recurrence_kernel(%arg0: i32, %arg1: i32, %arg2: memref<1x64x128xf32, #tpu.memory_space<vmem>>, %arg3: memref<32x128xf32, #tpu.memory_space<vmem>>, %arg4: memref<8x32xf32, #tpu.memory_space<vmem>>, %arg5: memref<8x32xf32, #tpu.memory_space<vmem>>, %arg6: memref<8x32xf32, #tpu.memory_space<vmem>>) attributes {dimension_semantics = [#tpu.dimension_semantics<parallel>, #tpu.dimension_semantics<arbitrary>], iteration_bounds = array<i64: 1, 1>, scalar_prefetch = 0 : i64, scratch_operands = 2 : i64, tpu.core_type = #tpu.core_type<tc>, window_params = [{transform_indices = @transform_0, window_bounds = array<i64: 1, 64, 128>}, {pipeline_mode = #tpu.pipeline_mode<synchronous>, transform_indices = @transform_1, window_bounds = array<i64: 32, 128>}, {transform_indices = @transform_2, window_bounds = array<i64: 8, 32>}]} {
    %c0_i32 = arith.constant 0 : i32
    %0 = arith.cmpi eq, %arg1, %c0_i32 : i32
    %1 = arith.extui %0 : i1 to i32
    %c0_i32_0 = arith.constant 0 : i32
    %2 = arith.cmpi ne, %1, %c0_i32_0 : i32
    scf.if %2 {
      %cst_68 = arith.constant 0.000000e+00 : f32
      %211 = vector.broadcast %cst_68 : f32 to vector<8x32xf32>
      %c0_69 = arith.constant 0 : index
      %c0_70 = arith.constant 0 : index
      %212 = vector.load %arg5[%c0_69, %c0_70] : memref<8x32xf32, #tpu.memory_space<vmem>>, vector<8x32xf32>
      tpu.vector_store %arg5[%c0_69, %c0_70], %211 {strides = array<i32>} : memref<8x32xf32, #tpu.memory_space<vmem>>, vector<8x32xf32>,
      %cst_71 = arith.constant 0.000000e+00 : f32
      %213 = vector.broadcast %cst_71 : f32 to vector<8x32xf32>
      %c0_72 = arith.constant 0 : index
      %c0_73 = arith.constant 0 : index
      %214 = vector.load %arg6[%c0_72, %c0_73] : memref<8x32xf32, #tpu.memory_space<vmem>>, vector<8x32xf32>
      tpu.vector_store %arg6[%c0_72, %c0_73], %213 {strides = array<i32>} : memref<8x32xf32, #tpu.memory_space<vmem>>, vector<8x32xf32>,
    } else {
    }
    %c0 = arith.constant 0 : index
    %c0_1 = arith.constant 0 : index
    %3 = vector.load %arg3[%c0, %c0_1] : memref<32x128xf32, #tpu.memory_space<vmem>>, vector<32x128xf32>
    %c0_2 = arith.constant 0 : index
    %c0_3 = arith.constant 0 : index
    %4 = vector.load %arg5[%c0_2, %c0_3] : memref<8x32xf32, #tpu.memory_space<vmem>>, vector<8x32xf32>
    %c0_4 = arith.constant 0 : index
    %c0_5 = arith.constant 0 : index
    %5 = vector.load %arg6[%c0_4, %c0_5] : memref<8x32xf32, #tpu.memory_space<vmem>>, vector<8x32xf32>
    %c0_i32_6 = arith.constant 0 : i32
    %c8_i32 = arith.constant 8 : i32
    %6 = arith.muli %c0_i32_6, %c8_i32 : i32
    %7 = tpu.assume_multiple %6, 8 : i32
    %c0_7 = arith.constant 0 : index
    %8 = arith.index_cast %7 : i32 to index
    %c0_8 = arith.constant 0 : index
    %9 = vector.load %arg2[%c0_7, %8, %c0_8] : memref<1x64x128xf32, #tpu.memory_space<vmem>>, vector<1x8x128xf32>
    %10 = vector.shape_cast %9 : vector<1x8x128xf32> to vector<8x128xf32>
    %cst = arith.constant dense<0.000000e+00> : vector<8x128xf32>
    %11 = tpu.matmul %4, %3, %cst {dimension_numbers = #tpu.dot_dimension_numbers<[1], [0], [0], [1], [0, 0, 1, 1], [], []>} : vector<8x32xf32>, vector<32x128xf32>, vector<8x128xf32> -> vector<8x128xf32>
    %12 = arith.addf %10, %11 : vector<8x128xf32>
    %13 = arith.negf %12 : vector<8x128xf32>
    %14 = math.exp %13 : vector<8x128xf32>
    %cst_9 = arith.constant 1.000000e+00 : f32
    %15 = vector.broadcast %cst_9 : f32 to vector<8x128xf32>
    %16 = arith.addf %15, %14 : vector<8x128xf32>
    %17 = arith.divf %15, %16 : vector<8x128xf32>
    %18 = vector.extract_strided_slice %17 {offsets = [0, 0], sizes = [8, 32], strides = [1, 1]} : vector<8x128xf32> to vector<8x32xf32>
    %19 = vector.extract_strided_slice %17 {offsets = [0, 32], sizes = [8, 32], strides = [1, 1]} : vector<8x128xf32> to vector<8x32xf32>
    %20 = vector.extract_strided_slice %17 {offsets = [0, 64], sizes = [8, 32], strides = [1, 1]} : vector<8x128xf32> to vector<8x32xf32>
    %cst_10 = arith.constant 2.000000e+00 : f32
    %21 = vector.broadcast %cst_10 : f32 to vector<8x32xf32>
    %22 = arith.mulf %21, %20 : vector<8x32xf32>
    %cst_11 = arith.constant 1.000000e+00 : f32
    %23 = vector.broadcast %cst_11 : f32 to vector<8x32xf32>
    %24 = arith.subf %22, %23 : vector<8x32xf32>
    %25 = vector.extract_strided_slice %17 {offsets = [0, 96], sizes = [8, 32], strides = [1, 1]} : vector<8x128xf32> to vector<8x32xf32>
    %26 = arith.mulf %19, %5 : vector<8x32xf32>
    %27 = arith.mulf %18, %24 : vector<8x32xf32>
    %28 = arith.addf %26, %27 : vector<8x32xf32>
    %29 = math.tanh %28 : vector<8x32xf32>
    %30 = arith.mulf %25, %29 : vector<8x32xf32>
    %c1_i32 = arith.constant 1 : i32
    %c8_i32_12 = arith.constant 8 : i32
    %31 = arith.muli %c1_i32, %c8_i32_12 : i32
    %32 = tpu.assume_multiple %31, 8 : i32
    %c0_13 = arith.constant 0 : index
    %33 = arith.index_cast %32 : i32 to index
    %c0_14 = arith.constant 0 : index
    %34 = vector.load %arg2[%c0_13, %33, %c0_14] : memref<1x64x128xf32, #tpu.memory_space<vmem>>, vector<1x8x128xf32>
    %35 = vector.shape_cast %34 : vector<1x8x128xf32> to vector<8x128xf32>
    %cst_15 = arith.constant dense<0.000000e+00> : vector<8x128xf32>
    %36 = tpu.matmul %30, %3, %cst_15 {dimension_numbers = #tpu.dot_dimension_numbers<[1], [0], [0], [1], [0, 0, 1, 1], [], []>} : vector<8x32xf32>, vector<32x128xf32>, vector<8x128xf32> -> vector<8x128xf32>
    %37 = arith.addf %35, %36 : vector<8x128xf32>
    %38 = arith.negf %37 : vector<8x128xf32>
    %39 = math.exp %38 : vector<8x128xf32>
    %cst_16 = arith.constant 1.000000e+00 : f32
    %40 = vector.broadcast %cst_16 : f32 to vector<8x128xf32>
    %41 = arith.addf %40, %39 : vector<8x128xf32>
    %42 = arith.divf %40, %41 : vector<8x128xf32>
    %43 = vector.extract_strided_slice %42 {offsets = [0, 0], sizes = [8, 32], strides = [1, 1]} : vector<8x128xf32> to vector<8x32xf32>
    %44 = vector.extract_strided_slice %42 {offsets = [0, 32], sizes = [8, 32], strides = [1, 1]} : vector<8x128xf32> to vector<8x32xf32>
    %45 = vector.extract_strided_slice %42 {offsets = [0, 64], sizes = [8, 32], strides = [1, 1]} : vector<8x128xf32> to vector<8x32xf32>
    %cst_17 = arith.constant 2.000000e+00 : f32
    %46 = vector.broadcast %cst_17 : f32 to vector<8x32xf32>
    %47 = arith.mulf %46, %45 : vector<8x32xf32>
    %cst_18 = arith.constant 1.000000e+00 : f32
    %48 = vector.broadcast %cst_18 : f32 to vector<8x32xf32>
    %49 = arith.subf %47, %48 : vector<8x32xf32>
    %50 = vector.extract_strided_slice %42 {offsets = [0, 96], sizes = [8, 32], strides = [1, 1]} : vector<8x128xf32> to vector<8x32xf32>
    %51 = arith.mulf %44, %28 : vector<8x32xf32>
    %52 = arith.mulf %43, %49 : vector<8x32xf32>
    %53 = arith.addf %51, %52 : vector<8x32xf32>
    %54 = math.tanh %53 : vector<8x32xf32>
    %55 = arith.mulf %50, %54 : vector<8x32xf32>
    %c2_i32 = arith.constant 2 : i32
    %c8_i32_19 = arith.constant 8 : i32
    %56 = arith.muli %c2_i32, %c8_i32_19 : i32
    %57 = tpu.assume_multiple %56, 8 : i32
    %c0_20 = arith.constant 0 : index
    %58 = arith.index_cast %57 : i32 to index
    %c0_21 = arith.constant 0 : index
    %59 = vector.load %arg2[%c0_20, %58, %c0_21] : memref<1x64x128xf32, #tpu.memory_space<vmem>>, vector<1x8x128xf32>
    %60 = vector.shape_cast %59 : vector<1x8x128xf32> to vector<8x128xf32>
    %cst_22 = arith.constant dense<0.000000e+00> : vector<8x128xf32>
    %61 = tpu.matmul %55, %3, %cst_22 {dimension_numbers = #tpu.dot_dimension_numbers<[1], [0], [0], [1], [0, 0, 1, 1], [], []>} : vector<8x32xf32>, vector<32x128xf32>, vector<8x128xf32> -> vector<8x128xf32>
    %62 = arith.addf %60, %61 : vector<8x128xf32>
    %63 = arith.negf %62 : vector<8x128xf32>
    %64 = math.exp %63 : vector<8x128xf32>
    %cst_23 = arith.constant 1.000000e+00 : f32
    %65 = vector.broadcast %cst_23 : f32 to vector<8x128xf32>
    %66 = arith.addf %65, %64 : vector<8x128xf32>
    %67 = arith.divf %65, %66 : vector<8x128xf32>
    %68 = vector.extract_strided_slice %67 {offsets = [0, 0], sizes = [8, 32], strides = [1, 1]} : vector<8x128xf32> to vector<8x32xf32>
    %69 = vector.extract_strided_slice %67 {offsets = [0, 32], sizes = [8, 32], strides = [1, 1]} : vector<8x128xf32> to vector<8x32xf32>
    %70 = vector.extract_strided_slice %67 {offsets = [0, 64], sizes = [8, 32], strides = [1, 1]} : vector<8x128xf32> to vector<8x32xf32>
    %cst_24 = arith.constant 2.000000e+00 : f32
    %71 = vector.broadcast %cst_24 : f32 to vector<8x32xf32>
    %72 = arith.mulf %71, %70 : vector<8x32xf32>
    %cst_25 = arith.constant 1.000000e+00 : f32
    %73 = vector.broadcast %cst_25 : f32 to vector<8x32xf32>
    %74 = arith.subf %72, %73 : vector<8x32xf32>
    %75 = vector.extract_strided_slice %67 {offsets = [0, 96], sizes = [8, 32], strides = [1, 1]} : vector<8x128xf32> to vector<8x32xf32>
    %76 = arith.mulf %69, %53 : vector<8x32xf32>
    %77 = arith.mulf %68, %74 : vector<8x32xf32>
    %78 = arith.addf %76, %77 : vector<8x32xf32>
    %79 = math.tanh %78 : vector<8x32xf32>
    %80 = arith.mulf %75, %79 : vector<8x32xf32>
    %c3_i32 = arith.constant 3 : i32
    %c8_i32_26 = arith.constant 8 : i32
    %81 = arith.muli %c3_i32, %c8_i32_26 : i32
    %82 = tpu.assume_multiple %81, 8 : i32
    %c0_27 = arith.constant 0 : index
    %83 = arith.index_cast %82 : i32 to index
    %c0_28 = arith.constant 0 : index
    %84 = vector.load %arg2[%c0_27, %83, %c0_28] : memref<1x64x128xf32, #tpu.memory_space<vmem>>, vector<1x8x128xf32>
    %85 = vector.shape_cast %84 : vector<1x8x128xf32> to vector<8x128xf32>
    %cst_29 = arith.constant dense<0.000000e+00> : vector<8x128xf32>
    %86 = tpu.matmul %80, %3, %cst_29 {dimension_numbers = #tpu.dot_dimension_numbers<[1], [0], [0], [1], [0, 0, 1, 1], [], []>} : vector<8x32xf32>, vector<32x128xf32>, vector<8x128xf32> -> vector<8x128xf32>
    %87 = arith.addf %85, %86 : vector<8x128xf32>
    %88 = arith.negf %87 : vector<8x128xf32>
    %89 = math.exp %88 : vector<8x128xf32>
    %cst_30 = arith.constant 1.000000e+00 : f32
    %90 = vector.broadcast %cst_30 : f32 to vector<8x128xf32>
    %91 = arith.addf %90, %89 : vector<8x128xf32>
    %92 = arith.divf %90, %91 : vector<8x128xf32>
    %93 = vector.extract_strided_slice %92 {offsets = [0, 0], sizes = [8, 32], strides = [1, 1]} : vector<8x128xf32> to vector<8x32xf32>
    %94 = vector.extract_strided_slice %92 {offsets = [0, 32], sizes = [8, 32], strides = [1, 1]} : vector<8x128xf32> to vector<8x32xf32>
    %95 = vector.extract_strided_slice %92 {offsets = [0, 64], sizes = [8, 32], strides = [1, 1]} : vector<8x128xf32> to vector<8x32xf32>
    %cst_31 = arith.constant 2.000000e+00 : f32
    %96 = vector.broadcast %cst_31 : f32 to vector<8x32xf32>
    %97 = arith.mulf %96, %95 : vector<8x32xf32>
    %cst_32 = arith.constant 1.000000e+00 : f32
    %98 = vector.broadcast %cst_32 : f32 to vector<8x32xf32>
    %99 = arith.subf %97, %98 : vector<8x32xf32>
    %100 = vector.extract_strided_slice %92 {offsets = [0, 96], sizes = [8, 32], strides = [1, 1]} : vector<8x128xf32> to vector<8x32xf32>
    %101 = arith.mulf %94, %78 : vector<8x32xf32>
    %102 = arith.mulf %93, %99 : vector<8x32xf32>
    %103 = arith.addf %101, %102 : vector<8x32xf32>
    %104 = math.tanh %103 : vector<8x32xf32>
    %105 = arith.mulf %100, %104 : vector<8x32xf32>
    %c4_i32 = arith.constant 4 : i32
    %c8_i32_33 = arith.constant 8 : i32
    %106 = arith.muli %c4_i32, %c8_i32_33 : i32
    %107 = tpu.assume_multiple %106, 8 : i32
    %c0_34 = arith.constant 0 : index
    %108 = arith.index_cast %107 : i32 to index
    %c0_35 = arith.constant 0 : index
    %109 = vector.load %arg2[%c0_34, %108, %c0_35] : memref<1x64x128xf32, #tpu.memory_space<vmem>>, vector<1x8x128xf32>
    %110 = vector.shape_cast %109 : vector<1x8x128xf32> to vector<8x128xf32>
    %cst_36 = arith.constant dense<0.000000e+00> : vector<8x128xf32>
    %111 = tpu.matmul %105, %3, %cst_36 {dimension_numbers = #tpu.dot_dimension_numbers<[1], [0], [0], [1], [0, 0, 1, 1], [], []>} : vector<8x32xf32>, vector<32x128xf32>, vector<8x128xf32> -> vector<8x128xf32>
    %112 = arith.addf %110, %111 : vector<8x128xf32>
    %113 = arith.negf %112 : vector<8x128xf32>
    %114 = math.exp %113 : vector<8x128xf32>
    %cst_37 = arith.constant 1.000000e+00 : f32
    %115 = vector.broadcast %cst_37 : f32 to vector<8x128xf32>
    %116 = arith.addf %115, %114 : vector<8x128xf32>
    %117 = arith.divf %115, %116 : vector<8x128xf32>
    %118 = vector.extract_strided_slice %117 {offsets = [0, 0], sizes = [8, 32], strides = [1, 1]} : vector<8x128xf32> to vector<8x32xf32>
    %119 = vector.extract_strided_slice %117 {offsets = [0, 32], sizes = [8, 32], strides = [1, 1]} : vector<8x128xf32> to vector<8x32xf32>
    %120 = vector.extract_strided_slice %117 {offsets = [0, 64], sizes = [8, 32], strides = [1, 1]} : vector<8x128xf32> to vector<8x32xf32>
    %cst_38 = arith.constant 2.000000e+00 : f32
    %121 = vector.broadcast %cst_38 : f32 to vector<8x32xf32>
    %122 = arith.mulf %121, %120 : vector<8x32xf32>
    %cst_39 = arith.constant 1.000000e+00 : f32
    %123 = vector.broadcast %cst_39 : f32 to vector<8x32xf32>
    %124 = arith.subf %122, %123 : vector<8x32xf32>
    %125 = vector.extract_strided_slice %117 {offsets = [0, 96], sizes = [8, 32], strides = [1, 1]} : vector<8x128xf32> to vector<8x32xf32>
    %126 = arith.mulf %119, %103 : vector<8x32xf32>
    %127 = arith.mulf %118, %124 : vector<8x32xf32>
    %128 = arith.addf %126, %127 : vector<8x32xf32>
    %129 = math.tanh %128 : vector<8x32xf32>
    %130 = arith.mulf %125, %129 : vector<8x32xf32>
    %c5_i32 = arith.constant 5 : i32
    %c8_i32_40 = arith.constant 8 : i32
    %131 = arith.muli %c5_i32, %c8_i32_40 : i32
    %132 = tpu.assume_multiple %131, 8 : i32
    %c0_41 = arith.constant 0 : index
    %133 = arith.index_cast %132 : i32 to index
    %c0_42 = arith.constant 0 : index
    %134 = vector.load %arg2[%c0_41, %133, %c0_42] : memref<1x64x128xf32, #tpu.memory_space<vmem>>, vector<1x8x128xf32>
    %135 = vector.shape_cast %134 : vector<1x8x128xf32> to vector<8x128xf32>
    %cst_43 = arith.constant dense<0.000000e+00> : vector<8x128xf32>
    %136 = tpu.matmul %130, %3, %cst_43 {dimension_numbers = #tpu.dot_dimension_numbers<[1], [0], [0], [1], [0, 0, 1, 1], [], []>} : vector<8x32xf32>, vector<32x128xf32>, vector<8x128xf32> -> vector<8x128xf32>
    %137 = arith.addf %135, %136 : vector<8x128xf32>
    %138 = arith.negf %137 : vector<8x128xf32>
    %139 = math.exp %138 : vector<8x128xf32>
    %cst_44 = arith.constant 1.000000e+00 : f32
    %140 = vector.broadcast %cst_44 : f32 to vector<8x128xf32>
    %141 = arith.addf %140, %139 : vector<8x128xf32>
    %142 = arith.divf %140, %141 : vector<8x128xf32>
    %143 = vector.extract_strided_slice %142 {offsets = [0, 0], sizes = [8, 32], strides = [1, 1]} : vector<8x128xf32> to vector<8x32xf32>
    %144 = vector.extract_strided_slice %142 {offsets = [0, 32], sizes = [8, 32], strides = [1, 1]} : vector<8x128xf32> to vector<8x32xf32>
    %145 = vector.extract_strided_slice %142 {offsets = [0, 64], sizes = [8, 32], strides = [1, 1]} : vector<8x128xf32> to vector<8x32xf32>
    %cst_45 = arith.constant 2.000000e+00 : f32
    %146 = vector.broadcast %cst_45 : f32 to vector<8x32xf32>
    %147 = arith.mulf %146, %145 : vector<8x32xf32>
    %cst_46 = arith.constant 1.000000e+00 : f32
    %148 = vector.broadcast %cst_46 : f32 to vector<8x32xf32>
    %149 = arith.subf %147, %148 : vector<8x32xf32>
    %150 = vector.extract_strided_slice %142 {offsets = [0, 96], sizes = [8, 32], strides = [1, 1]} : vector<8x128xf32> to vector<8x32xf32>
    %151 = arith.mulf %144, %128 : vector<8x32xf32>
    %152 = arith.mulf %143, %149 : vector<8x32xf32>
    %153 = arith.addf %151, %152 : vector<8x32xf32>
    %154 = math.tanh %153 : vector<8x32xf32>
    %155 = arith.mulf %150, %154 : vector<8x32xf32>
    %c6_i32 = arith.constant 6 : i32
    %c8_i32_47 = arith.constant 8 : i32
    %156 = arith.muli %c6_i32, %c8_i32_47 : i32
    %157 = tpu.assume_multiple %156, 8 : i32
    %c0_48 = arith.constant 0 : index
    %158 = arith.index_cast %157 : i32 to index
    %c0_49 = arith.constant 0 : index
    %159 = vector.load %arg2[%c0_48, %158, %c0_49] : memref<1x64x128xf32, #tpu.memory_space<vmem>>, vector<1x8x128xf32>
    %160 = vector.shape_cast %159 : vector<1x8x128xf32> to vector<8x128xf32>
    %cst_50 = arith.constant dense<0.000000e+00> : vector<8x128xf32>
    %161 = tpu.matmul %155, %3, %cst_50 {dimension_numbers = #tpu.dot_dimension_numbers<[1], [0], [0], [1], [0, 0, 1, 1], [], []>} : vector<8x32xf32>, vector<32x128xf32>, vector<8x128xf32> -> vector<8x128xf32>
    %162 = arith.addf %160, %161 : vector<8x128xf32>
    %163 = arith.negf %162 : vector<8x128xf32>
    %164 = math.exp %163 : vector<8x128xf32>
    %cst_51 = arith.constant 1.000000e+00 : f32
    %165 = vector.broadcast %cst_51 : f32 to vector<8x128xf32>
    %166 = arith.addf %165, %164 : vector<8x128xf32>
    %167 = arith.divf %165, %166 : vector<8x128xf32>
    %168 = vector.extract_strided_slice %167 {offsets = [0, 0], sizes = [8, 32], strides = [1, 1]} : vector<8x128xf32> to vector<8x32xf32>
    %169 = vector.extract_strided_slice %167 {offsets = [0, 32], sizes = [8, 32], strides = [1, 1]} : vector<8x128xf32> to vector<8x32xf32>
    %170 = vector.extract_strided_slice %167 {offsets = [0, 64], sizes = [8, 32], strides = [1, 1]} : vector<8x128xf32> to vector<8x32xf32>
    %cst_52 = arith.constant 2.000000e+00 : f32
    %171 = vector.broadcast %cst_52 : f32 to vector<8x32xf32>
    %172 = arith.mulf %171, %170 : vector<8x32xf32>
    %cst_53 = arith.constant 1.000000e+00 : f32
    %173 = vector.broadcast %cst_53 : f32 to vector<8x32xf32>
    %174 = arith.subf %172, %173 : vector<8x32xf32>
    %175 = vector.extract_strided_slice %167 {offsets = [0, 96], sizes = [8, 32], strides = [1, 1]} : vector<8x128xf32> to vector<8x32xf32>
    %176 = arith.mulf %169, %153 : vector<8x32xf32>
    %177 = arith.mulf %168, %174 : vector<8x32xf32>
    %178 = arith.addf %176, %177 : vector<8x32xf32>
    %179 = math.tanh %178 : vector<8x32xf32>
    %180 = arith.mulf %175, %179 : vector<8x32xf32>
    %c7_i32 = arith.constant 7 : i32
    %c8_i32_54 = arith.constant 8 : i32
    %181 = arith.muli %c7_i32, %c8_i32_54 : i32
    %182 = tpu.assume_multiple %181, 8 : i32
    %c0_55 = arith.constant 0 : index
    %183 = arith.index_cast %182 : i32 to index
    %c0_56 = arith.constant 0 : index
    %184 = vector.load %arg2[%c0_55, %183, %c0_56] : memref<1x64x128xf32, #tpu.memory_space<vmem>>, vector<1x8x128xf32>
    %185 = vector.shape_cast %184 : vector<1x8x128xf32> to vector<8x128xf32>
    %cst_57 = arith.constant dense<0.000000e+00> : vector<8x128xf32>
    %186 = tpu.matmul %180, %3, %cst_57 {dimension_numbers = #tpu.dot_dimension_numbers<[1], [0], [0], [1], [0, 0, 1, 1], [], []>} : vector<8x32xf32>, vector<32x128xf32>, vector<8x128xf32> -> vector<8x128xf32>
    %187 = arith.addf %185, %186 : vector<8x128xf32>
    %188 = arith.negf %187 : vector<8x128xf32>
    %189 = math.exp %188 : vector<8x128xf32>
    %cst_58 = arith.constant 1.000000e+00 : f32
    %190 = vector.broadcast %cst_58 : f32 to vector<8x128xf32>
    %191 = arith.addf %190, %189 : vector<8x128xf32>
    %192 = arith.divf %190, %191 : vector<8x128xf32>
    %193 = vector.extract_strided_slice %192 {offsets = [0, 0], sizes = [8, 32], strides = [1, 1]} : vector<8x128xf32> to vector<8x32xf32>
    %194 = vector.extract_strided_slice %192 {offsets = [0, 32], sizes = [8, 32], strides = [1, 1]} : vector<8x128xf32> to vector<8x32xf32>
    %195 = vector.extract_strided_slice %192 {offsets = [0, 64], sizes = [8, 32], strides = [1, 1]} : vector<8x128xf32> to vector<8x32xf32>
    %cst_59 = arith.constant 2.000000e+00 : f32
    %196 = vector.broadcast %cst_59 : f32 to vector<8x32xf32>
    %197 = arith.mulf %196, %195 : vector<8x32xf32>
    %cst_60 = arith.constant 1.000000e+00 : f32
    %198 = vector.broadcast %cst_60 : f32 to vector<8x32xf32>
    %199 = arith.subf %197, %198 : vector<8x32xf32>
    %200 = vector.extract_strided_slice %192 {offsets = [0, 96], sizes = [8, 32], strides = [1, 1]} : vector<8x128xf32> to vector<8x32xf32>
    %201 = arith.mulf %194, %178 : vector<8x32xf32>
    %202 = arith.mulf %193, %199 : vector<8x32xf32>
    %203 = arith.addf %201, %202 : vector<8x32xf32>
    %204 = math.tanh %203 : vector<8x32xf32>
    %205 = arith.mulf %200, %204 : vector<8x32xf32>
    %c8_i32_61 = arith.constant 8 : i32
    %c0_62 = arith.constant 0 : index
    %c0_63 = arith.constant 0 : index
    %206 = vector.load %arg5[%c0_62, %c0_63] : memref<8x32xf32, #tpu.memory_space<vmem>>, vector<8x32xf32>
    tpu.vector_store %arg5[%c0_62, %c0_63], %205 {strides = array<i32>} : memref<8x32xf32, #tpu.memory_space<vmem>>, vector<8x32xf32>,
    %c0_64 = arith.constant 0 : index
    %c0_65 = arith.constant 0 : index
    %207 = vector.load %arg6[%c0_64, %c0_65] : memref<8x32xf32, #tpu.memory_space<vmem>>, vector<8x32xf32>
    tpu.vector_store %arg6[%c0_64, %c0_65], %203 {strides = array<i32>} : memref<8x32xf32, #tpu.memory_space<vmem>>, vector<8x32xf32>,
    %c0_i32_66 = arith.constant 0 : i32
    %208 = arith.cmpi eq, %arg1, %c0_i32_66 : i32
    %209 = arith.extui %208 : i1 to i32
    %c0_i32_67 = arith.constant 0 : i32
    %210 = arith.cmpi ne, %209, %c0_i32_67 : i32
    scf.if %210 {
      %c0_68 = arith.constant 0 : index
      %c0_69 = arith.constant 0 : index
      %211 = vector.load %arg4[%c0_68, %c0_69] : memref<8x32xf32, #tpu.memory_space<vmem>>, vector<8x32xf32>
      tpu.vector_store %arg4[%c0_68, %c0_69], %205 {strides = array<i32>} : memref<8x32xf32, #tpu.memory_space<vmem>>, vector<8x32xf32>,
    } else {
    }
    return
  }
  func.func @transform_0(%arg0: i32, %arg1: i32) -> (i32, i32, i32) {
    %c0_i32 = arith.constant 0 : i32
    %c0_i32_0 = arith.constant 0 : i32
    return %arg0, %arg1, %c0_i32 : i32, i32, i32
  }
  func.func @transform_1(%arg0: i32, %arg1: i32) -> (i32, i32) {
    %c0_i32 = arith.constant 0 : i32
    %c0_i32_0 = arith.constant 0 : i32
    %c0_i32_1 = arith.constant 0 : i32
    return %c0_i32, %c0_i32_0 : i32, i32
  }
  func.func @transform_2(%arg0: i32, %arg1: i32) -> (i32, i32) {
    %c0_i32 = arith.constant 0 : i32
    %c0_i32_0 = arith.constant 0 : i32
    return %arg0, %c0_i32 : i32, i32
  }
}

</mosaic_0001>

<llo_original>
// kernel: tpu_custom_call.1
$region0: #{tpu_custom_call.1}
  #allocation0 [shape = 'u32[]', space=smem, size = 0x4, offset = 0x4, fixed_abs, tag = 'smem constant byte address 0x4 - core index']
  #allocation1 [shape = 'u32[144,128]{1,0:T(1,128)}', space=vmem, size = 0x12000, scoped, tag = 'internal scratch']
  #allocation2 [shape = 'f32[8,32]{1,0:T(8,128)}', space=vmem, size = 0x1000, scoped, tag = 'scratch operand']
  #allocation3 [shape = 'f32[8,32]{1,0:T(8,128)}', space=vmem, size = 0x1000, scoped, tag = 'scratch operand']
  %s0 = inlined_call_operand.hbm [shape: f32[1,64,128], index: 0, kind: input, shape index: {}]
  %s1 = inlined_call_operand.hbm [shape: f32[32,128], index: 1, kind: input, shape index: {}]
  %s2 = inlined_call_operand.hbm [shape: f32[8,32], index: 2, kind: output, shape index: {}]
  %s3 = sld [smem:[#allocation0]]
  $region34: #{tpu_custom_call.1} parent=0
    _
  %s5 = ssub.s32 1, %s3
  %s6 = scalar_select 0, %s5, %s3
  $region1: #{tpu_custom_call.1} parent=0
    #allocation4 [shape = 'u8[32768]{0}', space=vmem, size = 0x8000, scoped, tag = 'input window, operand 0, single buffered']
    #allocation5 [shape = 's32[1]{0}', space=sflag, size = 0x4, scoped, tag = 'scoped memory for tpu_custom_call.1']
    #allocation6 [shape = 's32[1]{0}', space=sflag, size = 0x4, scoped, tag = 'scoped memory for tpu_custom_call.1']
    #allocation7 [shape = 'u8[16384]{0}', space=vmem, size = 0x4000, scoped, tag = 'input window, operand 1, single buffered']
    #allocation8 [shape = 's32[1]{0}', space=sflag, size = 0x4, scoped, tag = 'scoped memory for tpu_custom_call.1']
    #allocation9 [shape = 'u8[4096]{0}', space=vmem, size = 0x1000, scoped, tag = 'output window, operand 0, single buffered']
    %7 = vsyncpa [#allocation5], 0
    %8 = vsyncpa [#allocation8], 0
    %9 = vsyncpa [#allocation6], 0
    // Predicated region
    $region2: #{tpu_custom_call.1} parent=1 // pred_check
      _
    $region3: #{tpu_custom_call.1} parent=1 // pred_check_branch
      %11 = sbr.rel (0) target = $region5
    $region4: #{tpu_custom_call.1} parent=1 // pred_region
      %s13 = ssub.s32 1024, 1024
      %14 = vsyncadd [#allocation5], %s13
      %s15 = sshll.u32 [#allocation4], 4
      %s16 = int_to_ptr.vmem [resolvable:$true] %s15
      %21 = dma.hbm_to_vmem [thread:$0]  %s0, 1024, %s16, [#allocation5], 128, 128, 8
    $region5: #{tpu_custom_call.1} parent=1 // pred_fallthru
      _
    // Predicated region
    $region6: #{tpu_custom_call.1} parent=1 // pred_check
      _
    $region7: #{tpu_custom_call.1} parent=1 // pred_check_branch
      %23 = sbr.rel (0) target = $region9
    $region8: #{tpu_custom_call.1} parent=1 // pred_region
      %s25 = ssub.s32 512, 512
      %26 = vsyncadd [#allocation8], %s25
      %s27 = sshll.u32 [#allocation7], 4
      %s28 = int_to_ptr.vmem [resolvable:$true] %s27
      %33 = dma.hbm_to_vmem [thread:$0]  %s1, 512, %s28, [#allocation8], 128, 128, 8
    $region9: #{tpu_custom_call.1} parent=1 // pred_fallthru
      _
    // Predicated region
    $region10: #{tpu_custom_call.1} parent=1 // pred_check
      _
    $region11: #{tpu_custom_call.1} parent=1 // pred_check_branch
      %35 = sbr.rel (0) target = $region13
    $region12: #{tpu_custom_call.1} parent=1 // pred_region
      %36 = dma.done [#allocation5], 1024
    $region13: #{tpu_custom_call.1} parent=1 // pred_fallthru
      _
    // Predicated region
    $region14: #{tpu_custom_call.1} parent=1 // pred_check
      _
    $region15: #{tpu_custom_call.1} parent=1 // pred_check_branch
      %38 = sbr.rel (0) target = $region17
    $region16: #{tpu_custom_call.1} parent=1 // pred_region
      %39 = dma.done [#allocation8], 512
    $region17: #{tpu_custom_call.1} parent=1 // pred_fallthru
      _
    %p40 = scmp.eq.s32.totalorder 0, 0
    // Predicated region
    $region18: #{tpu_custom_call.1} parent=1 // pred_check
      %p41 = pneg %p40
    $region19: #{tpu_custom_call.1} parent=1 // pred_check_branch
      %43 = sbr.rel (%p41) target = $region21
    $region20: #{tpu_custom_call.1} parent=1 // pred_region
      %vm44 = vcmask 261120
      %45 = vst.msk [vmem:[#allocation2] sm:$0xff] %vm44, 0.0
      %46 = vst.msk [vmem:[#allocation3] sm:$0xff] %vm44, 0.0
    $region21: #{tpu_custom_call.1} parent=1 // pred_fallthru
      _
    %v47 = vld [vmem:[#allocation7] sm:$0xff]
    %v48 = vld [vmem:[#allocation7 + $0x8] sm:$0xff]
    %v49 = vld [vmem:[#allocation7 + $0x10] sm:$0xff]
    %v50 = vld [vmem:[#allocation7 + $0x18] sm:$0xff]
    %v51 = vld [vmem:[#allocation2] sm:$0xff]
    %v52 = vld [vmem:[#allocation3] sm:$0xff]
    %v53 = vld [vmem:[#allocation4] sm:$0xff]
    %vm54 = vcmask 261120
    %v56 = vsel %vm54, %v51, 0
    %58 = vmatprep.subr.mxu0 0.0
    %59 = vmatpush1.msra.mxu0 %v47
    %60 = vmatprep.subr.mxu0 0.0
    %61 = vmatpush1.msra.mxu0 %v48
    %62 = vmatprep.subr.mxu0 0.0
    %63 = vmatpush1.msra.mxu0 %v49
    %64 = vmatprep.subr.mxu0 0.0
    %65 = vmatpush1.msra.mxu0 %v50
    %66 = vmatprep.subr.mxu0 0.0
    %67 = vmatpush1.msra.mxu0 0.0
    %68 = vmatprep.subr.mxu0 0.0
    %69 = vmatpush1.msra.mxu0 0.0
    %70 = vmatprep.subr.mxu0 0.0
    %71 = vmatpush1.msra.mxu0 0.0
    %72 = vmatprep.subr.mxu0 0.0
    %73 = vmatpush1.msra.mxu0 0.0
    %74 = vmatprep.subr.mxu0 0.0
    %75 = vmatpush1.msra.mxu0 0.0
    %76 = vmatprep.subr.mxu0 0.0
    %77 = vmatpush1.msra.mxu0 0.0
    %78 = vmatprep.subr.mxu0 0.0
    %79 = vmatpush1.msra.mxu0 0.0
    %80 = vmatprep.subr.mxu0 0.0
    %81 = vmatpush1.msra.mxu0 0.0
    %82 = vmatprep.subr.mxu0 0.0
    %83 = vmatpush1.msra.mxu0 0.0
    %84 = vmatprep.subr.mxu0 0.0
    %85 = vmatpush1.msra.mxu0 0.0
    %86 = vmatprep.subr.mxu0 0.0
    %87 = vmatpush1.msra.mxu0 0.0
    %88 = vmatprep.subr.mxu0 0.0
    %89 = vmatpush1.msra.mxu0 0.0
    %90 = vmatprep.subr.mxu0 0.0
    %91 = vmatpush1.msra.mxu0 0.0
    %92 = vmatprep.subr.mxu0 0.0
    %93 = vmatpush1.msra.mxu0 0.0
    %94 = vmatprep.subr.mxu0 0.0
    %95 = vmatpush1.msra.mxu0 0.0
    %96 = vmatprep.subr.mxu0 0.0
    %97 = vmatpush1.msra.mxu0 0.0
    %98 = vmatprep.subr.mxu0 0.0
    %99 = vmatpush1.msra.mxu0 0.0
    %100 = vmatprep.subr.mxu0 0.0
    %101 = vmatpush1.msra.mxu0 0.0
    %102 = vmatprep.subr.mxu0 0.0
    %103 = vmatpush1.msra.mxu0 0.0
    %104 = vmatprep.subr.mxu0 0.0
    %105 = vmatpush1.msra.mxu0 0.0
    %106 = vmatprep.subr.mxu0 0.0
    %107 = vmatpush1.msra.mxu0 0.0
    %108 = vmatprep.subr.mxu0 0.0
    %109 = vmatpush1.msra.mxu0 0.0
    %110 = vmatprep.subr.mxu0 0.0
    %111 = vmatpush1.msra.mxu0 0.0
    %112 = vmatprep.subr.mxu0 0.0
    %113 = vmatpush1.msra.mxu0 0.0
    %114 = vmatprep.subr.mxu0 0.0
    %115 = vmatpush1.msra.mxu0 0.0
    %116 = vmatprep.subr.mxu0 0.0
    %117 = vmatpush1.msra.mxu0 0.0
    %118 = vmatprep.subr.mxu0 0.0
    %119 = vmatpush1.msra.mxu0 0.0
    %120 = vmatprep.subr.mxu0 0.0
    %121 = vmatpush1.msra.mxu0 0.0
    %122 = vmatprep.mubr.f32.mxu0 0.0
    %123 = vmatmul.mubr.f32.gmra.mrb[0].mxu0 %v56
    %v124 = vpop.f32.mrb[0].mxu0
    %v125 = vadd.f32 0.0, %v124
    %v126 = vpop.f32.mrb[0].mxu0
    %127 = vdwg.mxu0
    %v128 = vadd.f32 %v53, %v125
    %v129 = vxor.u32 %v128, 2147483648
    %v130 = vmul.f32 %v129, 1.442695
    %v131 = vpow.pop %v130
    %v132 = vadd.f32 %v131, 1.0
    %v133 = vrcp.pop %v132
    %v134 = vmul.f32 1.0, %v133
    %v135 = vmul.f32 %v134, 2.0
    %v136 = vsub.f32 %v135, 1.0
    %138 = vrot.lane.b32.xlu0 %v52, 32
    %v139 = vpop.permute.xlu0 %138
    %v141 = vmul.f32 %v134, %v139
    %143 = vrot.lane.b32.xlu0 %v136, 64
    %v144 = vpop.permute.xlu0 %143
    %v146 = vmul.f32 %v134, %v144
    %148 = vrot.lane.b32.xlu0 %v146, 32
    %v149 = vpop.permute.xlu0 %148
    %v151 = vadd.f32 %v141, %v149
    %v152 = vtanh.pop %v151
    %154 = vrot.lane.b32.xlu0 %v152, 64
    %v155 = vpop.permute.xlu0 %154
    %v157 = vmul.f32 %v134, %v155
    %s158 = scalar_lea.vmem [#allocation4], 8
    %v159 = vld [vmem:[%s158] sm:$0xff]
    %161 = vrot.lane.b32.xlu0 %v157, 32
    %v162 = vpop.permute.xlu0 %161
    %v163 = vsel %vm54, %v162, 0
    %165 = vmatprep.subr.mxu0 0.0
    %166 = vmatpush1.msra.mxu0 %v47
    %167 = vmatprep.subr.mxu0 0.0
    %168 = vmatpush1.msra.mxu0 %v48
    %169 = vmatprep.subr.mxu0 0.0
    %170 = vmatpush1.msra.mxu0 %v49
    %171 = vmatprep.subr.mxu0 0.0
    %172 = vmatpush1.msra.mxu0 %v50
    %173 = vmatprep.subr.mxu0 0.0
    %174 = vmatpush1.msra.mxu0 0.0
    %175 = vmatprep.subr.mxu0 0.0
    %176 = vmatpush1.msra.mxu0 0.0
    %177 = vmatprep.subr.mxu0 0.0
    %178 = vmatpush1.msra.mxu0 0.0
    %179 = vmatprep.subr.mxu0 0.0
    %180 = vmatpush1.msra.mxu0 0.0
    %181 = vmatprep.subr.mxu0 0.0
    %182 = vmatpush1.msra.mxu0 0.0
    %183 = vmatprep.subr.mxu0 0.0
    %184 = vmatpush1.msra.mxu0 0.0
    %185 = vmatprep.subr.mxu0 0.0
    %186 = vmatpush1.msra.mxu0 0.0
    %187 = vmatprep.subr.mxu0 0.0
    %188 = vmatpush1.msra.mxu0 0.0
    %189 = vmatprep.subr.mxu0 0.0
    %190 = vmatpush1.msra.mxu0 0.0
    %191 = vmatprep.subr.mxu0 0.0
    %192 = vmatpush1.msra.mxu0 0.0
    %193 = vmatprep.subr.mxu0 0.0
    %194 = vmatpush1.msra.mxu0 0.0
    %195 = vmatprep.subr.mxu0 0.0
    %196 = vmatpush1.msra.mxu0 0.0
    %197 = vmatprep.subr.mxu0 0.0
    %198 = vmatpush1.msra.mxu0 0.0
    %199 = vmatprep.subr.mxu0 0.0
    %200 = vmatpush1.msra.mxu0 0.0
    %201 = vmatprep.subr.mxu0 0.0
    %202 = vmatpush1.msra.mxu0 0.0
    %203 = vmatprep.subr.mxu0 0.0
    %204 = vmatpush1.msra.mxu0 0.0
    %205 = vmatprep.subr.mxu0 0.0
    %206 = vmatpush1.msra.mxu0 0.0
    %207 = vmatprep.subr.mxu0 0.0
    %208 = vmatpush1.msra.mxu0 0.0
    %209 = vmatprep.subr.mxu0 0.0
    %210 = vmatpush1.msra.mxu0 0.0
    %211 = vmatprep.subr.mxu0 0.0
    %212 = vmatpush1.msra.mxu0 0.0
    %213 = vmatprep.subr.mxu0 0.0
    %214 = vmatpush1.msra.mxu0 0.0
    %215 = vmatprep.subr.mxu0 0.0
    %216 = vmatpush1.msra.mxu0 0.0
    %217 = vmatprep.subr.mxu0 0.0
    %218 = vmatpush1.msra.mxu0 0.0
    %219 = vmatprep.subr.mxu0 0.0
    %220 = vmatpush1.msra.mxu0 0.0
    %221 = vmatprep.subr.mxu0 0.0
    %222 = vmatpush1.msra.mxu0 0.0
    %223 = vmatprep.subr.mxu0 0.0
    %224 = vmatpush1.msra.mxu0 0.0
    %225 = vmatprep.subr.mxu0 0.0
    %226 = vmatpush1.msra.mxu0 0.0
    %227 = vmatprep.subr.mxu0 0.0
    %228 = vmatpush1.msra.mxu0 0.0
    %229 = vmatprep.mubr.f32.mxu0 0.0
    %230 = vmatmul.mubr.f32.gmra.mrb[0].mxu0 %v163
    %v231 = vpop.f32.mrb[0].mxu0
    %v232 = vadd.f32 0.0, %v231
    %v233 = vpop.f32.mrb[0].mxu0
    %234 = vdwg.mxu0
    %v235 = vadd.f32 %v159, %v232
    %v236 = vxor.u32 %v235, 2147483648
    %v237 = vmul.f32 %v236, 1.442695
    %v238 = vpow.pop %v237
    %v239 = vadd.f32 %v238, 1.0
    %v240 = vrcp.pop %v239
    %v241 = vmul.f32 1.0, %v240
    %v242 = vmul.f32 %v241, 2.0
    %v243 = vsub.f32 %v242, 1.0
    %v244 = vmul.f32 %v241, %v151
    %246 = vrot.lane.b32.xlu0 %v243, 64
    %v247 = vpop.permute.xlu0 %246
    %v249 = vmul.f32 %v241, %v247
    %251 = vrot.lane.b32.xlu0 %v249, 32
    %v252 = vpop.permute.xlu0 %251
    %v254 = vadd.f32 %v244, %v252
    %v255 = vtanh.pop %v254
    %257 = vrot.lane.b32.xlu0 %v255, 64
    %v258 = vpop.permute.xlu0 %257
    %v260 = vmul.f32 %v241, %v258
    %s261 = scalar_lea.vmem [#allocation4], 16
    %v262 = vld [vmem:[%s261] sm:$0xff]
    %264 = vrot.lane.b32.xlu0 %v260, 32
    %v265 = vpop.permute.xlu0 %264
    %v266 = vsel %vm54, %v265, 0
    %268 = vmatprep.subr.mxu0 0.0
    %269 = vmatpush1.msra.mxu0 %v47
    %270 = vmatprep.subr.mxu0 0.0
    %271 = vmatpush1.msra.mxu0 %v48
    %272 = vmatprep.subr.mxu0 0.0
    %273 = vmatpush1.msra.mxu0 %v49
    %274 = vmatprep.subr.mxu0 0.0
    %275 = vmatpush1.msra.mxu0 %v50
    %276 = vmatprep.subr.mxu0 0.0
    %277 = vmatpush1.msra.mxu0 0.0
    %278 = vmatprep.subr.mxu0 0.0
    %279 = vmatpush1.msra.mxu0 0.0
    %280 = vmatprep.subr.mxu0 0.0
    %281 = vmatpush1.msra.mxu0 0.0
    %282 = vmatprep.subr.mxu0 0.0
    %283 = vmatpush1.msra.mxu0 0.0
    %284 = vmatprep.subr.mxu0 0.0
    %285 = vmatpush1.msra.mxu0 0.0
    %286 = vmatprep.subr.mxu0 0.0
    %287 = vmatpush1.msra.mxu0 0.0
    %288 = vmatprep.subr.mxu0 0.0
    %289 = vmatpush1.msra.mxu0 0.0
    %290 = vmatprep.subr.mxu0 0.0
    %291 = vmatpush1.msra.mxu0 0.0
    %292 = vmatprep.subr.mxu0 0.0
    %293 = vmatpush1.msra.mxu0 0.0
    %294 = vmatprep.subr.mxu0 0.0
    %295 = vmatpush1.msra.mxu0 0.0
    %296 = vmatprep.subr.mxu0 0.0
    %297 = vmatpush1.msra.mxu0 0.0
    %298 = vmatprep.subr.mxu0 0.0
    %299 = vmatpush1.msra.mxu0 0.0
    %300 = vmatprep.subr.mxu0 0.0
    %301 = vmatpush1.msra.mxu0 0.0
    %302 = vmatprep.subr.mxu0 0.0
    %303 = vmatpush1.msra.mxu0 0.0
    %304 = vmatprep.subr.mxu0 0.0
    %305 = vmatpush1.msra.mxu0 0.0
    %306 = vmatprep.subr.mxu0 0.0
    %307 = vmatpush1.msra.mxu0 0.0
    %308 = vmatprep.subr.mxu0 0.0
    %309 = vmatpush1.msra.mxu0 0.0
    %310 = vmatprep.subr.mxu0 0.0
    %311 = vmatpush1.msra.mxu0 0.0
    %312 = vmatprep.subr.mxu0 0.0
    %313 = vmatpush1.msra.mxu0 0.0
    %314 = vmatprep.subr.mxu0 0.0
    %315 = vmatpush1.msra.mxu0 0.0
    %316 = vmatprep.subr.mxu0 0.0
    %317 = vmatpush1.msra.mxu0 0.0
    %318 = vmatprep.subr.mxu0 0.0
    %319 = vmatpush1.msra.mxu0 0.0
    %320 = vmatprep.subr.mxu0 0.0
    %321 = vmatpush1.msra.mxu0 0.0
    %322 = vmatprep.subr.mxu0 0.0
    %323 = vmatpush1.msra.mxu0 0.0
    %324 = vmatprep.subr.mxu0 0.0
    %325 = vmatpush1.msra.mxu0 0.0
    %326 = vmatprep.subr.mxu0 0.0
    %327 = vmatpush1.msra.mxu0 0.0
    %328 = vmatprep.subr.mxu0 0.0
    %329 = vmatpush1.msra.mxu0 0.0
    %330 = vmatprep.subr.mxu0 0.0
    %331 = vmatpush1.msra.mxu0 0.0
    %332 = vmatprep.mubr.f32.mxu0 0.0
    %333 = vmatmul.mubr.f32.gmra.mrb[0].mxu0 %v266
    %v334 = vpop.f32.mrb[0].mxu0
    %v335 = vadd.f32 0.0, %v334
    %v336 = vpop.f32.mrb[0].mxu0
    %337 = vdwg.mxu0
    %v338 = vadd.f32 %v262, %v335
    %v339 = vxor.u32 %v338, 2147483648
    %v340 = vmul.f32 %v339, 1.442695
    %v341 = vpow.pop %v340
    %v342 = vadd.f32 %v341, 1.0
    %v343 = vrcp.pop %v342
    %v344 = vmul.f32 1.0, %v343
    %v345 = vmul.f32 %v344, 2.0
    %v346 = vsub.f32 %v345, 1.0
    %v347 = vmul.f32 %v344, %v254
    %349 = vrot.lane.b32.xlu0 %v346, 64
    %v350 = vpop.permute.xlu0 %349
    %v352 = vmul.f32 %v344, %v350
    %354 = vrot.lane.b32.xlu0 %v352, 32
    %v355 = vpop.permute.xlu0 %354
    %v357 = vadd.f32 %v347, %v355
    %v358 = vtanh.pop %v357
    %360 = vrot.lane.b32.xlu0 %v358, 64
    %v361 = vpop.permute.xlu0 %360
    %v363 = vmul.f32 %v344, %v361
    %s364 = scalar_lea.vmem [#allocation4], 24
    %v365 = vld [vmem:[%s364] sm:$0xff]
    %367 = vrot.lane.b32.xlu0 %v363, 32
    %v368 = vpop.permute.xlu0 %367
    %v369 = vsel %vm54, %v368, 0
    %371 = vmatprep.subr.mxu0 0.0
    %372 = vmatpush1.msra.mxu0 %v47
    %373 = vmatprep.subr.mxu0 0.0
    %374 = vmatpush1.msra.mxu0 %v48
    %375 = vmatprep.subr.mxu0 0.0
    %376 = vmatpush1.msra.mxu0 %v49
    %377 = vmatprep.subr.mxu0 0.0
    %378 = vmatpush1.msra.mxu0 %v50
    %379 = vmatprep.subr.mxu0 0.0
    %380 = vmatpush1.msra.mxu0 0.0
    %381 = vmatprep.subr.mxu0 0.0
    %382 = vmatpush1.msra.mxu0 0.0
    %383 = vmatprep.subr.mxu0 0.0
    %384 = vmatpush1.msra.mxu0 0.0
    %385 = vmatprep.subr.mxu0 0.0
    %386 = vmatpush1.msra.mxu0 0.0
    %387 = vmatprep.subr.mxu0 0.0
    %388 = vmatpush1.msra.mxu0 0.0
    %389 = vmatprep.subr.mxu0 0.0
    %390 = vmatpush1.msra.mxu0 0.0
    %391 = vmatprep.subr.mxu0 0.0
    %392 = vmatpush1.msra.mxu0 0.0
    %393 = vmatprep.subr.mxu0 0.0
    %394 = vmatpush1.msra.mxu0 0.0
    %395 = vmatprep.subr.mxu0 0.0
    %396 = vmatpush1.msra.mxu0 0.0
    %397 = vmatprep.subr.mxu0 0.0
    %398 = vmatpush1.msra.mxu0 0.0
    %399 = vmatprep.subr.mxu0 0.0
    %400 = vmatpush1.msra.mxu0 0.0
    %401 = vmatprep.subr.mxu0 0.0
    %402 = vmatpush1.msra.mxu0 0.0
    %403 = vmatprep.subr.mxu0 0.0
    %404 = vmatpush1.msra.mxu0 0.0
    %405 = vmatprep.subr.mxu0 0.0
    %406 = vmatpush1.msra.mxu0 0.0
    %407 = vmatprep.subr.mxu0 0.0
    %408 = vmatpush1.msra.mxu0 0.0
    %409 = vmatprep.subr.mxu0 0.0
    %410 = vmatpush1.msra.mxu0 0.0
    %411 = vmatprep.subr.mxu0 0.0
    %412 = vmatpush1.msra.mxu0 0.0
    %413 = vmatprep.subr.mxu0 0.0
    %414 = vmatpush1.msra.mxu0 0.0
    %415 = vmatprep.subr.mxu0 0.0
    %416 = vmatpush1.msra.mxu0 0.0
    %417 = vmatprep.subr.mxu0 0.0
    %418 = vmatpush1.msra.mxu0 0.0
    %419 = vmatprep.subr.mxu0 0.0
    %420 = vmatpush1.msra.mxu0 0.0
    %421 = vmatprep.subr.mxu0 0.0
    %422 = vmatpush1.msra.mxu0 0.0
    %423 = vmatprep.subr.mxu0 0.0
    %424 = vmatpush1.msra.mxu0 0.0
    %425 = vmatprep.subr.mxu0 0.0
    %426 = vmatpush1.msra.mxu0 0.0
    %427 = vmatprep.subr.mxu0 0.0
    %428 = vmatpush1.msra.mxu0 0.0
    %429 = vmatprep.subr.mxu0 0.0
    %430 = vmatpush1.msra.mxu0 0.0
    %431 = vmatprep.subr.mxu0 0.0
    %432 = vmatpush1.msra.mxu0 0.0
    %433 = vmatprep.subr.mxu0 0.0
    %434 = vmatpush1.msra.mxu0 0.0
    %435 = vmatprep.mubr.f32.mxu0 0.0
    %436 = vmatmul.mubr.f32.gmra.mrb[0].mxu0 %v369
    %v437 = vpop.f32.mrb[0].mxu0
    %v438 = vadd.f32 0.0, %v437
    %v439 = vpop.f32.mrb[0].mxu0
    %440 = vdwg.mxu0
    %v441 = vadd.f32 %v365, %v438
    %v442 = vxor.u32 %v441, 2147483648
    %v443 = vmul.f32 %v442, 1.442695
    %v444 = vpow.pop %v443
    %v445 = vadd.f32 %v444, 1.0
    %v446 = vrcp.pop %v445
    %v447 = vmul.f32 1.0, %v446
    %v448 = vmul.f32 %v447, 2.0
    %v449 = vsub.f32 %v448, 1.0
    %v450 = vmul.f32 %v447, %v357
    %452 = vrot.lane.b32.xlu0 %v449, 64
    %v453 = vpop.permute.xlu0 %452
    %v455 = vmul.f32 %v447, %v453
    %457 = vrot.lane.b32.xlu0 %v455, 32
    %v458 = vpop.permute.xlu0 %457
    %v460 = vadd.f32 %v450, %v458
    %v461 = vtanh.pop %v460
    %463 = vrot.lane.b32.xlu0 %v461, 64
    %v464 = vpop.permute.xlu0 %463
    %v466 = vmul.f32 %v447, %v464
    %s467 = scalar_lea.vmem [#allocation4], 32
    %v468 = vld [vmem:[%s467] sm:$0xff]
    %470 = vrot.lane.b32.xlu0 %v466, 32
    %v471 = vpop.permute.xlu0 %470
    %v472 = vsel %vm54, %v471, 0
    %474 = vmatprep.subr.mxu0 0.0
    %475 = vmatpush1.msra.mxu0 %v47
    %476 = vmatprep.subr.mxu0 0.0
    %477 = vmatpush1.msra.mxu0 %v48
    %478 = vmatprep.subr.mxu0 0.0
    %479 = vmatpush1.msra.mxu0 %v49
    %480 = vmatprep.subr.mxu0 0.0
    %481 = vmatpush1.msra.mxu0 %v50
    %482 = vmatprep.subr.mxu0 0.0
    %483 = vmatpush1.msra.mxu0 0.0
    %484 = vmatprep.subr.mxu0 0.0
    %485 = vmatpush1.msra.mxu0 0.0
    %486 = vmatprep.subr.mxu0 0.0
    %487 = vmatpush1.msra.mxu0 0.0
    %488 = vmatprep.subr.mxu0 0.0
    %489 = vmatpush1.msra.mxu0 0.0
    %490 = vmatprep.subr.mxu0 0.0
    %491 = vmatpush1.msra.mxu0 0.0
    %492 = vmatprep.subr.mxu0 0.0
    %493 = vmatpush1.msra.mxu0 0.0
    %494 = vmatprep.subr.mxu0 0.0
    %495 = vmatpush1.msra.mxu0 0.0
    %496 = vmatprep.subr.mxu0 0.0
    %497 = vmatpush1.msra.mxu0 0.0
    %498 = vmatprep.subr.mxu0 0.0
    %499 = vmatpush1.msra.mxu0 0.0
    %500 = vmatprep.subr.mxu0 0.0
    %501 = vmatpush1.msra.mxu0 0.0
    %502 = vmatprep.subr.mxu0 0.0
    %503 = vmatpush1.msra.mxu0 0.0
    %504 = vmatprep.subr.mxu0 0.0
    %505 = vmatpush1.msra.mxu0 0.0
    %506 = vmatprep.subr.mxu0 0.0
    %507 = vmatpush1.msra.mxu0 0.0
    %508 = vmatprep.subr.mxu0 0.0
    %509 = vmatpush1.msra.mxu0 0.0
    %510 = vmatprep.subr.mxu0 0.0
    %511 = vmatpush1.msra.mxu0 0.0
    %512 = vmatprep.subr.mxu0 0.0
    %513 = vmatpush1.msra.mxu0 0.0
    %514 = vmatprep.subr.mxu0 0.0
    %515 = vmatpush1.msra.mxu0 0.0
    %516 = vmatprep.subr.mxu0 0.0
    %517 = vmatpush1.msra.mxu0 0.0
    %518 = vmatprep.subr.mxu0 0.0
    %519 = vmatpush1.msra.mxu0 0.0
    %520 = vmatprep.subr.mxu0 0.0
    %521 = vmatpush1.msra.mxu0 0.0
    %522 = vmatprep.subr.mxu0 0.0
    %523 = vmatpush1.msra.mxu0 0.0
    %524 = vmatprep.subr.mxu0 0.0
    %525 = vmatpush1.msra.mxu0 0.0
    %526 = vmatprep.subr.mxu0 0.0
    %527 = vmatpush1.msra.mxu0 0.0
    %528 = vmatprep.subr.mxu0 0.0
    %529 = vmatpush1.msra.mxu0 0.0
    %530 = vmatprep.subr.mxu0 0.0
    %531 = vmatpush1.msra.mxu0 0.0
    %532 = vmatprep.subr.mxu0 0.0
    %533 = vmatpush1.msra.mxu0 0.0
    %534 = vmatprep.subr.mxu0 0.0
    %535 = vmatpush1.msra.mxu0 0.0
    %536 = vmatprep.subr.mxu0 0.0
    %537 = vmatpush1.msra.mxu0 0.0
    %538 = vmatprep.mubr.f32.mxu0 0.0
    %539 = vmatmul.mubr.f32.gmra.mrb[0].mxu0 %v472
    %v540 = vpop.f32.mrb[0].mxu0
    %v541 = vadd.f32 0.0, %v540
    %v542 = vpop.f32.mrb[0].mxu0
    %543 = vdwg.mxu0
    %v544 = vadd.f32 %v468, %v541
    %v545 = vxor.u32 %v544, 2147483648
    %v546 = vmul.f32 %v545, 1.442695
    %v547 = vpow.pop %v546
    %v548 = vadd.f32 %v547, 1.0
    %v549 = vrcp.pop %v548
    %v550 = vmul.f32 1.0, %v549
    %v551 = vmul.f32 %v550, 2.0
    %v552 = vsub.f32 %v551, 1.0
    %v553 = vmul.f32 %v550, %v460
    %555 = vrot.lane.b32.xlu0 %v552, 64
    %v556 = vpop.permute.xlu0 %555
    %v558 = vmul.f32 %v550, %v556
    %560 = vrot.lane.b32.xlu0 %v558, 32
    %v561 = vpop.permute.xlu0 %560
    %v563 = vadd.f32 %v553, %v561
    %v564 = vtanh.pop %v563
    %566 = vrot.lane.b32.xlu0 %v564, 64
    %v567 = vpop.permute.xlu0 %566
    %v569 = vmul.f32 %v550, %v567
    %s570 = scalar_lea.vmem [#allocation4], 40
    %v571 = vld [vmem:[%s570] sm:$0xff]
    %573 = vrot.lane.b32.xlu0 %v569, 32
    %v574 = vpop.permute.xlu0 %573
    %v575 = vsel %vm54, %v574, 0
    %577 = vmatprep.subr.mxu0 0.0
    %578 = vmatpush1.msra.mxu0 %v47
    %579 = vmatprep.subr.mxu0 0.0
    %580 = vmatpush1.msra.mxu0 %v48
    %581 = vmatprep.subr.mxu0 0.0
    %582 = vmatpush1.msra.mxu0 %v49
    %583 = vmatprep.subr.mxu0 0.0
    %584 = vmatpush1.msra.mxu0 %v50
    %585 = vmatprep.subr.mxu0 0.0
    %586 = vmatpush1.msra.mxu0 0.0
    %587 = vmatprep.subr.mxu0 0.0
    %588 = vmatpush1.msra.mxu0 0.0
    %589 = vmatprep.subr.mxu0 0.0
    %590 = vmatpush1.msra.mxu0 0.0
    %591 = vmatprep.subr.mxu0 0.0
    %592 = vmatpush1.msra.mxu0 0.0
    %593 = vmatprep.subr.mxu0 0.0
    %594 = vmatpush1.msra.mxu0 0.0
    %595 = vmatprep.subr.mxu0 0.0
    %596 = vmatpush1.msra.mxu0 0.0
    %597 = vmatprep.subr.mxu0 0.0
    %598 = vmatpush1.msra.mxu0 0.0
    %599 = vmatprep.subr.mxu0 0.0
    %600 = vmatpush1.msra.mxu0 0.0
    %601 = vmatprep.subr.mxu0 0.0
    %602 = vmatpush1.msra.mxu0 0.0
    %603 = vmatprep.subr.mxu0 0.0
    %604 = vmatpush1.msra.mxu0 0.0
    %605 = vmatprep.subr.mxu0 0.0
    %606 = vmatpush1.msra.mxu0 0.0
    %607 = vmatprep.subr.mxu0 0.0
    %608 = vmatpush1.msra.mxu0 0.0
    %609 = vmatprep.subr.mxu0 0.0
    %610 = vmatpush1.msra.mxu0 0.0
    %611 = vmatprep.subr.mxu0 0.0
    %612 = vmatpush1.msra.mxu0 0.0
    %613 = vmatprep.subr.mxu0 0.0
    %614 = vmatpush1.msra.mxu0 0.0
    %615 = vmatprep.subr.mxu0 0.0
    %616 = vmatpush1.msra.mxu0 0.0
    %617 = vmatprep.subr.mxu0 0.0
    %618 = vmatpush1.msra.mxu0 0.0
    %619 = vmatprep.subr.mxu0 0.0
    %620 = vmatpush1.msra.mxu0 0.0
    %621 = vmatprep.subr.mxu0 0.0
    %622 = vmatpush1.msra.mxu0 0.0
    %623 = vmatprep.subr.mxu0 0.0
    %624 = vmatpush1.msra.mxu0 0.0
    %625 = vmatprep.subr.mxu0 0.0
    %626 = vmatpush1.msra.mxu0 0.0
    %627 = vmatprep.subr.mxu0 0.0
    %628 = vmatpush1.msra.mxu0 0.0
    %629 = vmatprep.subr.mxu0 0.0
    %630 = vmatpush1.msra.mxu0 0.0
    %631 = vmatprep.subr.mxu0 0.0
    %632 = vmatpush1.msra.mxu0 0.0
    %633 = vmatprep.subr.mxu0 0.0
    %634 = vmatpush1.msra.mxu0 0.0
    %635 = vmatprep.subr.mxu0 0.0
    %636 = vmatpush1.msra.mxu0 0.0
    %637 = vmatprep.subr.mxu0 0.0
    %638 = vmatpush1.msra.mxu0 0.0
    %639 = vmatprep.subr.mxu0 0.0
    %640 = vmatpush1.msra.mxu0 0.0
    %641 = vmatprep.mubr.f32.mxu0 0.0
    %642 = vmatmul.mubr.f32.gmra.mrb[0].mxu0 %v575
    %v643 = vpop.f32.mrb[0].mxu0
    %v644 = vadd.f32 0.0, %v643
    %v645 = vpop.f32.mrb[0].mxu0
    %646 = vdwg.mxu0
    %v647 = vadd.f32 %v571, %v644
    %v648 = vxor.u32 %v647, 2147483648
    %v649 = vmul.f32 %v648, 1.442695
    %v650 = vpow.pop %v649
    %v651 = vadd.f32 %v650, 1.0
    %v652 = vrcp.pop %v651
    %v653 = vmul.f32 1.0, %v652
    %v654 = vmul.f32 %v653, 2.0
    %v655 = vsub.f32 %v654, 1.0
    %v656 = vmul.f32 %v653, %v563
    %658 = vrot.lane.b32.xlu0 %v655, 64
    %v659 = vpop.permute.xlu0 %658
    %v661 = vmul.f32 %v653, %v659
    %663 = vrot.lane.b32.xlu0 %v661, 32
    %v664 = vpop.permute.xlu0 %663
    %v666 = vadd.f32 %v656, %v664
    %v667 = vtanh.pop %v666
    %669 = vrot.lane.b32.xlu0 %v667, 64
    %v670 = vpop.permute.xlu0 %669
    %v672 = vmul.f32 %v653, %v670
    %s673 = scalar_lea.vmem [#allocation4], 48
    %v674 = vld [vmem:[%s673] sm:$0xff]
    %676 = vrot.lane.b32.xlu0 %v672, 32
    %v677 = vpop.permute.xlu0 %676
    %v678 = vsel %vm54, %v677, 0
    %680 = vmatprep.subr.mxu0 0.0
    %681 = vmatpush1.msra.mxu0 %v47
    %682 = vmatprep.subr.mxu0 0.0
    %683 = vmatpush1.msra.mxu0 %v48
    %684 = vmatprep.subr.mxu0 0.0
    %685 = vmatpush1.msra.mxu0 %v49
    %686 = vmatprep.subr.mxu0 0.0
    %687 = vmatpush1.msra.mxu0 %v50
    %688 = vmatprep.subr.mxu0 0.0
    %689 = vmatpush1.msra.mxu0 0.0
    %690 = vmatprep.subr.mxu0 0.0
    %691 = vmatpush1.msra.mxu0 0.0
    %692 = vmatprep.subr.mxu0 0.0
    %693 = vmatpush1.msra.mxu0 0.0
    %694 = vmatprep.subr.mxu0 0.0
    %695 = vmatpush1.msra.mxu0 0.0
    %696 = vmatprep.subr.mxu0 0.0
    %697 = vmatpush1.msra.mxu0 0.0
    %698 = vmatprep.subr.mxu0 0.0
    %699 = vmatpush1.msra.mxu0 0.0
    %700 = vmatprep.subr.mxu0 0.0
    %701 = vmatpush1.msra.mxu0 0.0
    %702 = vmatprep.subr.mxu0 0.0
    %703 = vmatpush1.msra.mxu0 0.0
    %704 = vmatprep.subr.mxu0 0.0
    %705 = vmatpush1.msra.mxu0 0.0
    %706 = vmatprep.subr.mxu0 0.0
    %707 = vmatpush1.msra.mxu0 0.0
    %708 = vmatprep.subr.mxu0 0.0
    %709 = vmatpush1.msra.mxu0 0.0
    %710 = vmatprep.subr.mxu0 0.0
    %711 = vmatpush1.msra.mxu0 0.0
    %712 = vmatprep.subr.mxu0 0.0
    %713 = vmatpush1.msra.mxu0 0.0
    %714 = vmatprep.subr.mxu0 0.0
    %715 = vmatpush1.msra.mxu0 0.0
    %716 = vmatprep.subr.mxu0 0.0
    %717 = vmatpush1.msra.mxu0 0.0
    %718 = vmatprep.subr.mxu0 0.0
    %719 = vmatpush1.msra.mxu0 0.0
    %720 = vmatprep.subr.mxu0 0.0
    %721 = vmatpush1.msra.mxu0 0.0
    %722 = vmatprep.subr.mxu0 0.0
    %723 = vmatpush1.msra.mxu0 0.0
    %724 = vmatprep.subr.mxu0 0.0
    %725 = vmatpush1.msra.mxu0 0.0
    %726 = vmatprep.subr.mxu0 0.0
    %727 = vmatpush1.msra.mxu0 0.0
    %728 = vmatprep.subr.mxu0 0.0
    %729 = vmatpush1.msra.mxu0 0.0
    %730 = vmatprep.subr.mxu0 0.0
    %731 = vmatpush1.msra.mxu0 0.0
    %732 = vmatprep.subr.mxu0 0.0
    %733 = vmatpush1.msra.mxu0 0.0
    %734 = vmatprep.subr.mxu0 0.0
    %735 = vmatpush1.msra.mxu0 0.0
    %736 = vmatprep.subr.mxu0 0.0
    %737 = vmatpush1.msra.mxu0 0.0
    %738 = vmatprep.subr.mxu0 0.0
    %739 = vmatpush1.msra.mxu0 0.0
    %740 = vmatprep.subr.mxu0 0.0
    %741 = vmatpush1.msra.mxu0 0.0
    %742 = vmatprep.subr.mxu0 0.0
    %743 = vmatpush1.msra.mxu0 0.0
    %744 = vmatprep.mubr.f32.mxu0 0.0
    %745 = vmatmul.mubr.f32.gmra.mrb[0].mxu0 %v678
    %v746 = vpop.f32.mrb[0].mxu0
    %v747 = vadd.f32 0.0, %v746
    %v748 = vpop.f32.mrb[0].mxu0
    %749 = vdwg.mxu0
    %v750 = vadd.f32 %v674, %v747
    %v751 = vxor.u32 %v750, 2147483648
    %v752 = vmul.f32 %v751, 1.442695
    %v753 = vpow.pop %v752
    %v754 = vadd.f32 %v753, 1.0
    %v755 = vrcp.pop %v754
    %v756 = vmul.f32 1.0, %v755
    %v757 = vmul.f32 %v756, 2.0
    %v758 = vsub.f32 %v757, 1.0
    %v759 = vmul.f32 %v756, %v666
    %761 = vrot.lane.b32.xlu0 %v758, 64
    %v762 = vpop.permute.xlu0 %761
    %v764 = vmul.f32 %v756, %v762
    %766 = vrot.lane.b32.xlu0 %v764, 32
    %v767 = vpop.permute.xlu0 %766
    %v769 = vadd.f32 %v759, %v767
    %v770 = vtanh.pop %v769
    %772 = vrot.lane.b32.xlu0 %v770, 64
    %v773 = vpop.permute.xlu0 %772
    %v775 = vmul.f32 %v756, %v773
    %s776 = scalar_lea.vmem [#allocation4], 56
    %v777 = vld [vmem:[%s776] sm:$0xff]
    %779 = vrot.lane.b32.xlu0 %v775, 32
    %v780 = vpop.permute.xlu0 %779
    %v781 = vsel %vm54, %v780, 0
    %783 = vmatprep.subr.mxu0 0.0
    %784 = vmatpush1.msra.mxu0 %v47
    %785 = vmatprep.subr.mxu0 0.0
    %786 = vmatpush1.msra.mxu0 %v48
    %787 = vmatprep.subr.mxu0 0.0
    %788 = vmatpush1.msra.mxu0 %v49
    %789 = vmatprep.subr.mxu0 0.0
    %790 = vmatpush1.msra.mxu0 %v50
    %791 = vmatprep.subr.mxu0 0.0
    %792 = vmatpush1.msra.mxu0 0.0
    %793 = vmatprep.subr.mxu0 0.0
    %794 = vmatpush1.msra.mxu0 0.0
    %795 = vmatprep.subr.mxu0 0.0
    %796 = vmatpush1.msra.mxu0 0.0
    %797 = vmatprep.subr.mxu0 0.0
    %798 = vmatpush1.msra.mxu0 0.0
    %799 = vmatprep.subr.mxu0 0.0
    %800 = vmatpush1.msra.mxu0 0.0
    %801 = vmatprep.subr.mxu0 0.0
    %802 = vmatpush1.msra.mxu0 0.0
    %803 = vmatprep.subr.mxu0 0.0
    %804 = vmatpush1.msra.mxu0 0.0
    %805 = vmatprep.subr.mxu0 0.0
    %806 = vmatpush1.msra.mxu0 0.0
    %807 = vmatprep.subr.mxu0 0.0
    %808 = vmatpush1.msra.mxu0 0.0
    %809 = vmatprep.subr.mxu0 0.0
    %810 = vmatpush1.msra.mxu0 0.0
    %811 = vmatprep.subr.mxu0 0.0
    %812 = vmatpush1.msra.mxu0 0.0
    %813 = vmatprep.subr.mxu0 0.0
    %814 = vmatpush1.msra.mxu0 0.0
    %815 = vmatprep.subr.mxu0 0.0
    %816 = vmatpush1.msra.mxu0 0.0
    %817 = vmatprep.subr.mxu0 0.0
    %818 = vmatpush1.msra.mxu0 0.0
    %819 = vmatprep.subr.mxu0 0.0
    %820 = vmatpush1.msra.mxu0 0.0
    %821 = vmatprep.subr.mxu0 0.0
    %822 = vmatpush1.msra.mxu0 0.0
    %823 = vmatprep.subr.mxu0 0.0
    %824 = vmatpush1.msra.mxu0 0.0
    %825 = vmatprep.subr.mxu0 0.0
    %826 = vmatpush1.msra.mxu0 0.0
    %827 = vmatprep.subr.mxu0 0.0
    %828 = vmatpush1.msra.mxu0 0.0
    %829 = vmatprep.subr.mxu0 0.0
    %830 = vmatpush1.msra.mxu0 0.0
    %831 = vmatprep.subr.mxu0 0.0
    %832 = vmatpush1.msra.mxu0 0.0
    %833 = vmatprep.subr.mxu0 0.0
    %834 = vmatpush1.msra.mxu0 0.0
    %835 = vmatprep.subr.mxu0 0.0
    %836 = vmatpush1.msra.mxu0 0.0
    %837 = vmatprep.subr.mxu0 0.0
    %838 = vmatpush1.msra.mxu0 0.0
    %839 = vmatprep.subr.mxu0 0.0
    %840 = vmatpush1.msra.mxu0 0.0
    %841 = vmatprep.subr.mxu0 0.0
    %842 = vmatpush1.msra.mxu0 0.0
    %843 = vmatprep.subr.mxu0 0.0
    %844 = vmatpush1.msra.mxu0 0.0
    %845 = vmatprep.subr.mxu0 0.0
    %846 = vmatpush1.msra.mxu0 0.0
    %847 = vmatprep.mubr.f32.mxu0 0.0
    %848 = vmatmul.mubr.f32.gmra.mrb[0].mxu0 %v781
    %v849 = vpop.f32.mrb[0].mxu0
    %v850 = vadd.f32 0.0, %v849
    %v851 = vpop.f32.mrb[0].mxu0
    %852 = vdwg.mxu0
    %v853 = vadd.f32 %v777, %v850
    %v854 = vxor.u32 %v853, 2147483648
    %v855 = vmul.f32 %v854, 1.442695
    %v856 = vpow.pop %v855
    %v857 = vadd.f32 %v856, 1.0
    %v858 = vrcp.pop %v857
    %v859 = vmul.f32 1.0, %v858
    %v860 = vmul.f32 %v859, 2.0
    %v861 = vsub.f32 %v860, 1.0
    %v862 = vmul.f32 %v859, %v769
    %864 = vrot.lane.b32.xlu0 %v861, 64
    %v865 = vpop.permute.xlu0 %864
    %v867 = vmul.f32 %v859, %v865
    %869 = vrot.lane.b32.xlu0 %v867, 32
    %v870 = vpop.permute.xlu0 %869
    %v872 = vadd.f32 %v862, %v870
    %v873 = vtanh.pop %v872
    %875 = vrot.lane.b32.xlu0 %v873, 64
    %v876 = vpop.permute.xlu0 %875
    %v878 = vmul.f32 %v859, %v876
    %880 = vrot.lane.b32.xlu0 %v878, 32
    %v881 = vpop.permute.xlu0 %880
    %883 = vst.msk [vmem:[#allocation2] sm:$0xff] %vm54, %v881
    %885 = vrot.lane.b32.xlu0 %v872, 96
    %v886 = vpop.permute.xlu0 %885
    %888 = vst.msk [vmem:[#allocation3] sm:$0xff] %vm54, %v886
    // Predicated region
    $region22: #{tpu_custom_call.1} parent=1 // pred_check
      %p889 = pneg %p40
    $region23: #{tpu_custom_call.1} parent=1 // pred_check_branch
      %891 = sbr.rel (%p889) target = $region25
    $region24: #{tpu_custom_call.1} parent=1 // pred_region
      %892 = vst.msk [vmem:[#allocation9] sm:$0xff] %vm54, %v881
    $region25: #{tpu_custom_call.1} parent=1 // pred_fallthru
      _
    // Predicated region
    $region26: #{tpu_custom_call.1} parent=1 // pred_check
      _
    $region27: #{tpu_custom_call.1} parent=1 // pred_check_branch
      %894 = sbr.rel (0) target = $region29
    $region28: #{tpu_custom_call.1} parent=1 // pred_region
      %s896 = ssub.s32 128, 128
      %897 = vsyncadd [#allocation6], %s896
      %s899 = sshll.u32 [#allocation9], 4
      %s900 = int_to_ptr.vmem [resolvable:$true] %s899
      %902 = dma.vmem_to_hbm [thread:$0]  %s900, 128, %s2, [#allocation6]
    $region29: #{tpu_custom_call.1} parent=1 // pred_fallthru
      _
    // Predicated region
    $region30: #{tpu_custom_call.1} parent=1 // pred_check
      _
    $region31: #{tpu_custom_call.1} parent=1 // pred_check_branch
      %904 = sbr.rel (0) target = $region33
    $region32: #{tpu_custom_call.1} parent=1 // pred_region
      %905 = dma.done [#allocation6], 128
    $region33: #{tpu_custom_call.1} parent=1 // pred_fallthru
      _
    %906 = vsyncpa [#allocation5], 1
    %907 = vsyncpa [#allocation8], 1
    %908 = vsyncpa [#allocation6], 1

</llo_original>
